<compile_context>
chip_gen: v7x
topology: tpu7x:2x2x1
jax: 0.10.0
libtpu: 0.0.40
codegen_flags: <defaults>
</compile_context>

<pallas_src>
import jax
import jax.numpy as jnp
from jax.experimental import pallas as pl
from jax.experimental.pallas import tpu as pltpu

LANE = 128


def _round_up(x, m):
    return ((x + m - 1) // m) * m


def actor_ppo_kernel(s_ref, w1_ref, b1_ref, w2_ref, b2_ref, w3_ref, b3_ref, o_ref):
    # Hot path: three MXU matmuls (bf16 operands, f32 accumulation),
    # ReLU on the VPU, tanh on the EUP — all VMEM-resident.
    x = s_ref[...]                                                       # bf16 [tb, S]
    h1 = jnp.dot(x, w1_ref[...], preferred_element_type=jnp.float32) + b1_ref[...]
    h1 = jnp.maximum(h1, 0.0).astype(jnp.bfloat16)
    h2 = jnp.dot(h1, w2_ref[...], preferred_element_type=jnp.float32) + b2_ref[...]
    h2 = jnp.maximum(h2, 0.0).astype(jnp.bfloat16)
    a_mean = jnp.dot(h2, w3_ref[...], preferred_element_type=jnp.float32) + b3_ref[...]
    o_ref[...] = jnp.tanh(a_mean)                                        # f32 [tb, N_pad]


def actor_ppo_forward(s, params, *, tile_b=512):
    """s: [B, state_dim] float32; params: dict of w1,b1,w2,b2,w3,b3 (f32).

    Returns tanh(net(s)) as [B, action_dim] float32.
    """
    B, state_dim = s.shape
    mid_dim = params["w1"].shape[1]
    action_dim = params["w3"].shape[1]

    # Lane-dense output width (pad action_dim up to a multiple of 128).
    n_out = _round_up(action_dim, LANE)

    # Batch tiling: clamp the tile to the (8-aligned) batch for tiny inputs,
    # then pad the batch to a whole number of tiles.
    tb = min(tile_b, _round_up(B, 8))
    b_pad = _round_up(B, tb)

    # Boundary prep: bf16 operands for the MXU, f32 biases, zero-padded
    # batch rows and output columns (discarded after the call).
    s_p = jnp.pad(s, ((0, b_pad - B), (0, 0))).astype(jnp.bfloat16)
    w1 = params["w1"].astype(jnp.bfloat16)
    w2 = params["w2"].astype(jnp.bfloat16)
    w3 = jnp.pad(params["w3"], ((0, 0), (0, n_out - action_dim))).astype(jnp.bfloat16)
    b1 = params["b1"].astype(jnp.float32)
    b2 = params["b2"].astype(jnp.float32)
    b3 = jnp.pad(params["b3"], ((0, 0), (0, n_out - action_dim))).astype(jnp.float32)

    grid = (b_pad // tb,)

    out = pl.pallas_call(
        actor_ppo_kernel,
        out_shape=jax.ShapeDtypeStruct((b_pad, n_out), jnp.float32),
        grid=grid,
        in_specs=[
            # Batch-tiled state: pipelined / double-buffered across grid steps.
            pl.BlockSpec((tb, state_dim), lambda i: (i, 0)),
            # Weights & biases: constant index_map -> VMEM-resident across tiles.
            pl.BlockSpec((state_dim, mid_dim), lambda i: (0, 0)),
            pl.BlockSpec((1, mid_dim), lambda i: (0, 0)),
            pl.BlockSpec((mid_dim, mid_dim), lambda i: (0, 0)),
            pl.BlockSpec((1, mid_dim), lambda i: (0, 0)),
            pl.BlockSpec((mid_dim, n_out), lambda i: (0, 0)),
            pl.BlockSpec((1, n_out), lambda i: (0, 0)),
        ],
        out_specs=pl.BlockSpec((tb, n_out), lambda i: (i, 0)),
        compiler_params=pltpu.CompilerParams(
            dimension_semantics=("parallel",),   # shards batch tiles across TCs on v7x
            vmem_limit_bytes=32 << 20,           # safe on v7x's 64 MiB physical VMEM
        ),
    )(s_p, w1, b1, w2, b2, w3, b3)

    # Slice away the batch / lane padding (free layout plumbing in XLA).
    return out[:B, :action_dim]


def init_params(key, state_dim, mid_dim, action_dim):
    """Deterministic synthetic init mirroring ActorPPO.__init__ shapes.

    net = Linear(state_dim, mid_dim) -> ReLU -> Linear(mid_dim, mid_dim)
          -> ReLU -> Linear(mid_dim, action_dim)  (last layer layer_norm(std=0.01),
          bias=1e-6).
    """
    k1, k2, k3 = jax.random.split(key, 3)
    w1 = jax.random.normal(k1, (state_dim, mid_dim), jnp.float32) * (1.0 / jnp.sqrt(state_dim))
    b1 = jnp.zeros((1, mid_dim), jnp.float32)
    w2 = jax.random.normal(k2, (mid_dim, mid_dim), jnp.float32) * (1.0 / jnp.sqrt(mid_dim))
    b2 = jnp.zeros((1, mid_dim), jnp.float32)
    w3 = jax.random.normal(k3, (mid_dim, action_dim), jnp.float32) * 0.01
    b3 = jnp.full((1, action_dim), 1e-6, jnp.float32)
    # a_std_log is only used by the log-prob methods, not forward().
    a_std_log = jnp.zeros((1, action_dim), jnp.float32) - 0.5
    return dict(w1=w1, b1=b1, w2=w2, b2=b2, w3=w3, b3=b3, a_std_log=a_std_log)


def reference_forward(s, p):
    h1 = jnp.maximum(s @ p["w1"] + p["b1"], 0.0)
    h2 = jnp.maximum(h1 @ p["w2"] + p["b2"], 0.0)
    return jnp.tanh(h2 @ p["w3"] + p["b3"])


if __name__ == "__main__":
    key = jax.random.PRNGKey(0)
    k_params, k_state = jax.random.split(key)

    batch, state_dim, mid_dim, action_dim = 8, 16, 32, 4
    params = init_params(k_params, state_dim, mid_dim, action_dim)
    s = jax.random.normal(k_state, (batch, state_dim), jnp.float32)

    out = actor_ppo_forward(s, params)
    out = jax.block_until_ready(out)

    ref = reference_forward(s, params)
    assert out.shape == (batch, action_dim)
    # bf16 MXU operands with f32 accumulation: loose-but-tight-enough tolerance.
    assert jnp.allclose(out, ref, atol=1e-2, rtol=5e-2), (
        f"max abs err = {jnp.max(jnp.abs(out - ref))}")

    # TODO(synk): get__a__log_prob / compute__log_prob (Gaussian sampling +
    # log-prob) are not part of forward(); only forward() is kernelized here.
    print("KERNEL_OK")
</pallas_src>

<mosaic_0001>
module attributes {stable_mosaic.version = 11 : i64} {
  func.func @actor_ppo_kernel(%arg0: i32, %arg1: memref<8x16xbf16, #tpu.memory_space<vmem>>, %arg2: memref<16x32xbf16, #tpu.memory_space<vmem>>, %arg3: memref<1x32xf32, #tpu.memory_space<vmem>>, %arg4: memref<32x32xbf16, #tpu.memory_space<vmem>>, %arg5: memref<1x32xf32, #tpu.memory_space<vmem>>, %arg6: memref<32x128xbf16, #tpu.memory_space<vmem>>, %arg7: memref<1x128xf32, #tpu.memory_space<vmem>>, %arg8: memref<8x128xf32, #tpu.memory_space<vmem>>) attributes {dimension_semantics = [#tpu.dimension_semantics<parallel>], iteration_bounds = array<i64: 1>, scalar_prefetch = 0 : i64, scratch_operands = 0 : i64, tpu.core_type = #tpu.core_type<tc>, window_params = [{transform_indices = @transform_0, window_bounds = array<i64: 8, 16>}, {pipeline_mode = #tpu.pipeline_mode<synchronous>, transform_indices = @transform_1, window_bounds = array<i64: 16, 32>}, {pipeline_mode = #tpu.pipeline_mode<synchronous>, transform_indices = @transform_2, window_bounds = array<i64: 1, 32>}, {pipeline_mode = #tpu.pipeline_mode<synchronous>, transform_indices = @transform_3, window_bounds = array<i64: 32, 32>}, {pipeline_mode = #tpu.pipeline_mode<synchronous>, transform_indices = @transform_4, window_bounds = array<i64: 1, 32>}, {pipeline_mode = #tpu.pipeline_mode<synchronous>, transform_indices = @transform_5, window_bounds = array<i64: 32, 128>}, {pipeline_mode = #tpu.pipeline_mode<synchronous>, transform_indices = @transform_6, window_bounds = array<i64: 1, 128>}, {transform_indices = @transform_7, window_bounds = array<i64: 8, 128>}]} {
    %c0 = arith.constant 0 : index
    %c0_0 = arith.constant 0 : index
    %0 = vector.load %arg1[%c0, %c0_0] : memref<8x16xbf16, #tpu.memory_space<vmem>>, vector<8x16xbf16>
    %c0_1 = arith.constant 0 : index
    %c0_2 = arith.constant 0 : index
    %1 = vector.load %arg2[%c0_1, %c0_2] : memref<16x32xbf16, #tpu.memory_space<vmem>>, vector<16x32xbf16>
    %cst = arith.constant dense<0.000000e+00> : vector<8x32xf32>
    %2 = tpu.matmul %0, %1, %cst {dimension_numbers = #tpu.dot_dimension_numbers<[1], [0], [0], [1], [0, 0, 1, 1], [], []>} : vector<8x16xbf16>, vector<16x32xbf16>, vector<8x32xf32> -> vector<8x32xf32>
    %c0_3 = arith.constant 0 : index
    %c0_4 = arith.constant 0 : index
    %3 = vector.load %arg3[%c0_3, %c0_4] : memref<1x32xf32, #tpu.memory_space<vmem>>, vector<1x32xf32>
    %4 = vector.broadcast %3 : vector<1x32xf32> to vector<8x32xf32>
    %5 = arith.addf %2, %4 : vector<8x32xf32>
    %cst_5 = arith.constant 0.000000e+00 : f32
    %6 = vector.broadcast %cst_5 : f32 to vector<8x32xf32>
    %7 = arith.maximumf %5, %6 : vector<8x32xf32>
    %8 = arith.truncf %7 : vector<8x32xf32> to vector<8x32xbf16>
    %c0_6 = arith.constant 0 : index
    %c0_7 = arith.constant 0 : index
    %9 = vector.load %arg4[%c0_6, %c0_7] : memref<32x32xbf16, #tpu.memory_space<vmem>>, vector<32x32xbf16>
    %cst_8 = arith.constant dense<0.000000e+00> : vector<8x32xf32>
    %10 = tpu.matmul %8, %9, %cst_8 {dimension_numbers = #tpu.dot_dimension_numbers<[1], [0], [0], [1], [0, 0, 1, 1], [], []>} : vector<8x32xbf16>, vector<32x32xbf16>, vector<8x32xf32> -> vector<8x32xf32>
    %c0_9 = arith.constant 0 : index
    %c0_10 = arith.constant 0 : index
    %11 = vector.load %arg5[%c0_9, %c0_10] : memref<1x32xf32, #tpu.memory_space<vmem>>, vector<1x32xf32>
    %12 = vector.broadcast %11 : vector<1x32xf32> to vector<8x32xf32>
    %13 = arith.addf %10, %12 : vector<8x32xf32>
    %cst_11 = arith.constant 0.000000e+00 : f32
    %14 = vector.broadcast %cst_11 : f32 to vector<8x32xf32>
    %15 = arith.maximumf %13, %14 : vector<8x32xf32>
    %16 = arith.truncf %15 : vector<8x32xf32> to vector<8x32xbf16>
    %c0_12 = arith.constant 0 : index
    %c0_13 = arith.constant 0 : index
    %17 = vector.load %arg6[%c0_12, %c0_13] : memref<32x128xbf16, #tpu.memory_space<vmem>>, vector<32x128xbf16>
    %cst_14 = arith.constant dense<0.000000e+00> : vector<8x128xf32>
    %18 = tpu.matmul %16, %17, %cst_14 {dimension_numbers = #tpu.dot_dimension_numbers<[1], [0], [0], [1], [0, 0, 1, 1], [], []>} : vector<8x32xbf16>, vector<32x128xbf16>, vector<8x128xf32> -> vector<8x128xf32>
    %c0_15 = arith.constant 0 : index
    %c0_16 = arith.constant 0 : index
    %19 = vector.load %arg7[%c0_15, %c0_16] : memref<1x128xf32, #tpu.memory_space<vmem>>, vector<1x128xf32>
    %20 = vector.broadcast %19 : vector<1x128xf32> to vector<8x128xf32>
    %21 = arith.addf %18, %20 : vector<8x128xf32>
    %22 = math.tanh %21 : vector<8x128xf32>
    %c0_17 = arith.constant 0 : index
    %c0_18 = arith.constant 0 : index
    %23 = vector.load %arg8[%c0_17, %c0_18] : memref<8x128xf32, #tpu.memory_space<vmem>>, vector<8x128xf32>
    tpu.vector_store %arg8[%c0_17, %c0_18], %22 {strides = array<i32>} : memref<8x128xf32, #tpu.memory_space<vmem>>, vector<8x128xf32>,
    return
  }
  func.func @transform_0(%arg0: i32) -> (i32, i32) {
    %c0_i32 = arith.constant 0 : i32
    %c0_i32_0 = arith.constant 0 : i32
    return %arg0, %c0_i32 : i32, i32
  }
  func.func @transform_1(%arg0: i32) -> (i32, i32) {
    %c0_i32 = arith.constant 0 : i32
    %c0_i32_0 = arith.constant 0 : i32
    %c0_i32_1 = arith.constant 0 : i32
    return %c0_i32, %c0_i32_0 : i32, i32
  }
  func.func @transform_2(%arg0: i32) -> (i32, i32) {
    %c0_i32 = arith.constant 0 : i32
    %c0_i32_0 = arith.constant 0 : i32
    %c0_i32_1 = arith.constant 0 : i32
    return %c0_i32, %c0_i32_0 : i32, i32
  }
  func.func @transform_3(%arg0: i32) -> (i32, i32) {
    %c0_i32 = arith.constant 0 : i32
    %c0_i32_0 = arith.constant 0 : i32
    %c0_i32_1 = arith.constant 0 : i32
    return %c0_i32, %c0_i32_0 : i32, i32
  }
  func.func @transform_4(%arg0: i32) -> (i32, i32) {
    %c0_i32 = arith.constant 0 : i32
    %c0_i32_0 = arith.constant 0 : i32
    %c0_i32_1 = arith.constant 0 : i32
    return %c0_i32, %c0_i32_0 : i32, i32
  }
  func.func @transform_5(%arg0: i32) -> (i32, i32) {
    %c0_i32 = arith.constant 0 : i32
    %c0_i32_0 = arith.constant 0 : i32
    %c0_i32_1 = arith.constant 0 : i32
    return %c0_i32, %c0_i32_0 : i32, i32
  }
  func.func @transform_6(%arg0: i32) -> (i32, i32) {
    %c0_i32 = arith.constant 0 : i32
    %c0_i32_0 = arith.constant 0 : i32
    %c0_i32_1 = arith.constant 0 : i32
    return %c0_i32, %c0_i32_0 : i32, i32
  }
  func.func @transform_7(%arg0: i32) -> (i32, i32) {
    %c0_i32 = arith.constant 0 : i32
    %c0_i32_0 = arith.constant 0 : i32
    return %arg0, %c0_i32 : i32, i32
  }
}

</mosaic_0001>

<llo_original>
// kernel: tpu_custom_call.1
$region0: #{tpu_custom_call.1}
  #allocation0 [shape = 'u32[]', space=smem, size = 0x4, offset = 0x4, fixed_abs, tag = 'smem constant byte address 0x4 - core index']
  #allocation1 [shape = 'u32[144,128]{1,0:T(1,128)}', space=vmem, size = 0x12000, scoped, tag = 'internal scratch']
  %s0 = inlined_call_operand.hbm [shape: bf16[8,16], index: 0, kind: input, shape index: {}]
  %s1 = inlined_call_operand.hbm [shape: bf16[16,32], index: 1, kind: input, shape index: {}]
  %s2 = inlined_call_operand.vmem [shape: f32[1,32], index: 2, kind: input, shape index: {}]
  %s3 = inlined_call_operand.hbm [shape: bf16[32,32], index: 3, kind: input, shape index: {}]
  %s4 = inlined_call_operand.vmem [shape: f32[1,32], index: 4, kind: input, shape index: {}]
  %s5 = inlined_call_operand.vmem [shape: bf16[32,128], index: 5, kind: input, shape index: {}]
  %s6 = inlined_call_operand.vmem [shape: f32[1,128], index: 6, kind: input, shape index: {}]
  %s7 = inlined_call_operand.hbm [shape: f32[8,128], index: 7, kind: output, shape index: {}]
  %s8 = sld [smem:[#allocation0]]
  $region50: #{tpu_custom_call.1} parent=0
    _
  %s10 = ssub.s32 1, %s8
  %s11 = scalar_select 0, %s10, %s8
  $region1: #{tpu_custom_call.1} parent=0
    #allocation2 [shape = 'u8[2048]{0}', space=vmem, size = 0x800, scoped, tag = 'input window, operand 0, single buffered']
    #allocation3 [shape = 's32[1]{0}', space=sflag, size = 0x4, scoped, tag = 'scoped memory for tpu_custom_call.1']
    #allocation4 [shape = 's32[1]{0}', space=sflag, size = 0x4, scoped, tag = 'scoped memory for tpu_custom_call.1']
    #allocation5 [shape = 'u8[4096]{0}', space=vmem, size = 0x1000, scoped, tag = 'input window, operand 1, single buffered']
    #allocation6 [shape = 's32[1]{0}', space=sflag, size = 0x4, scoped, tag = 'scoped memory for tpu_custom_call.1']
    #allocation7 [shape = 'u8[8192]{0}', space=vmem, size = 0x2000, scoped, tag = 'input window, operand 3, single buffered']
    #allocation8 [shape = 'u8[4096]{0}', space=vmem, size = 0x1000, scoped, tag = 'output window, operand 0, single buffered']
    %12 = vsyncpa [#allocation3], 0
    %13 = vsyncpa [#allocation6], 0
    %14 = vsyncpa [#allocation4], 0
    // Predicated region
    $region2: #{tpu_custom_call.1} parent=1 // pred_check
      _
    $region3: #{tpu_custom_call.1} parent=1 // pred_check_branch
      %16 = sbr.rel (0) target = $region5
    $region4: #{tpu_custom_call.1} parent=1 // pred_region
      %s18 = ssub.s32 64, 64
      %19 = vsyncadd [#allocation3], %s18
      %s21 = sshll.u32 [#allocation2], 4
      %s22 = int_to_ptr.vmem [resolvable:$true] %s21
      %24 = dma.hbm_to_vmem [thread:$0]  %s0, 64, %s22, [#allocation3]
    $region5: #{tpu_custom_call.1} parent=1 // pred_fallthru
      _
    // Predicated region
    $region6: #{tpu_custom_call.1} parent=1 // pred_check
      _
    $region7: #{tpu_custom_call.1} parent=1 // pred_check_branch
      %26 = sbr.rel (0) target = $region9
    $region8: #{tpu_custom_call.1} parent=1 // pred_region
      %s28 = ssub.s32 128, 128
      %29 = vsyncadd [#allocation6], %s28
      %s30 = sshll.u32 [#allocation5], 4
      %s31 = int_to_ptr.vmem [resolvable:$true] %s30
      %36 = dma.hbm_to_vmem [thread:$0]  %s1, 128, %s31, [#allocation6], 64, 64, 4
    $region9: #{tpu_custom_call.1} parent=1 // pred_fallthru
      _
    // Predicated region
    $region10: #{tpu_custom_call.1} parent=1 // pred_check
      _
    $region11: #{tpu_custom_call.1} parent=1 // pred_check_branch
      %38 = sbr.rel (0) target = $region13
    $region12: #{tpu_custom_call.1} parent=1 // pred_region
      _
    $region13: #{tpu_custom_call.1} parent=1 // pred_fallthru
      _
    // Predicated region
    $region14: #{tpu_custom_call.1} parent=1 // pred_check
      _
    $region15: #{tpu_custom_call.1} parent=1 // pred_check_branch
      %40 = sbr.rel (0) target = $region17
    $region16: #{tpu_custom_call.1} parent=1 // pred_region
      %s42 = ssub.s32 256, 256
      %43 = vsyncadd [#allocation6], %s42
      %s44 = sshll.u32 [#allocation7], 4
      %s45 = int_to_ptr.vmem [resolvable:$true] %s44
      %50 = dma.hbm_to_vmem [thread:$0]  %s3, 256, %s45, [#allocation6], 64, 64, 4
    $region17: #{tpu_custom_call.1} parent=1 // pred_fallthru
      _
    // Predicated region
    $region18: #{tpu_custom_call.1} parent=1 // pred_check
      _
    $region19: #{tpu_custom_call.1} parent=1 // pred_check_branch
      %52 = sbr.rel (0) target = $region21
    $region20: #{tpu_custom_call.1} parent=1 // pred_region
      _
    $region21: #{tpu_custom_call.1} parent=1 // pred_fallthru
      _
    // Predicated region
    $region22: #{tpu_custom_call.1} parent=1 // pred_check
      _
    $region23: #{tpu_custom_call.1} parent=1 // pred_check_branch
      %54 = sbr.rel (0) target = $region25
    $region24: #{tpu_custom_call.1} parent=1 // pred_region
      _
    $region25: #{tpu_custom_call.1} parent=1 // pred_fallthru
      _
    // Predicated region
    $region26: #{tpu_custom_call.1} parent=1 // pred_check
      _
    $region27: #{tpu_custom_call.1} parent=1 // pred_check_branch
      %56 = sbr.rel (0) target = $region29
    $region28: #{tpu_custom_call.1} parent=1 // pred_region
      _
    $region29: #{tpu_custom_call.1} parent=1 // pred_fallthru
      _
    // Predicated region
    $region30: #{tpu_custom_call.1} parent=1 // pred_check
      _
    $region31: #{tpu_custom_call.1} parent=1 // pred_check_branch
      %58 = sbr.rel (0) target = $region33
    $region32: #{tpu_custom_call.1} parent=1 // pred_region
      %59 = dma.done [#allocation3], 64
    $region33: #{tpu_custom_call.1} parent=1 // pred_fallthru
      _
    // Predicated region
    $region34: #{tpu_custom_call.1} parent=1 // pred_check
      _
    $region35: #{tpu_custom_call.1} parent=1 // pred_check_branch
      %61 = sbr.rel (0) target = $region37
    $region36: #{tpu_custom_call.1} parent=1 // pred_region
      %62 = dma.done [#allocation6], 128
    $region37: #{tpu_custom_call.1} parent=1 // pred_fallthru
      _
    // Predicated region
    $region38: #{tpu_custom_call.1} parent=1 // pred_check
      _
    $region39: #{tpu_custom_call.1} parent=1 // pred_check_branch
      %64 = sbr.rel (0) target = $region41
    $region40: #{tpu_custom_call.1} parent=1 // pred_region
      %65 = dma.done [#allocation6], 256
    $region41: #{tpu_custom_call.1} parent=1 // pred_fallthru
      _
    %v67 = vld [vmem:[#allocation2] sm:$0xf]
    %v68 = vld [vmem:[#allocation5] sm:$0xf]
    %v69 = vld [vmem:[#allocation5 + $0x4] sm:$0xf]
    %v70 = vld [vmem:[%s2] sm:$0x1]
    %v72 = vlaneseq
    %v73 = vshrl.u32 %v72, 7
    %v74 = vsub.s32 0, %v73
    %v75 = vrot.slane %v70, %v74
    %v79 = vunpack.c.l.b16 %v68
    %v80 = vunpack.c.l.b16 %v69
    %v81 = vpack.c.b16 %v80, %v79
    %vm83 = vcmask 130048
    %v85 = vsel %vm83, %v67, 0
    %87 = vmatprep.subr.bf16.mxu0 0
    %88 = vmatpush1.bf16.msra.mxu0 %v81
    %89 = vmatprep.subr.bf16.mxu0 0
    %90 = vmatpush1.bf16.msra.mxu0 0
    %91 = vmatprep.subr.bf16.mxu0 0
    %92 = vmatpush1.bf16.msra.mxu0 0
    %93 = vmatprep.subr.bf16.mxu0 0
    %94 = vmatpush1.bf16.msra.mxu0 0
    %95 = vmatprep.subr.bf16.mxu0 0
    %96 = vmatpush1.bf16.msra.mxu0 0
    %97 = vmatprep.subr.bf16.mxu0 0
    %98 = vmatpush1.bf16.msra.mxu0 0
    %99 = vmatprep.subr.bf16.mxu0 0
    %100 = vmatpush1.bf16.msra.mxu0 0
    %101 = vmatprep.subr.bf16.mxu0 0
    %102 = vmatpush1.bf16.msra.mxu0 0
    %103 = vmatprep.subr.bf16.mxu0 0
    %104 = vmatpush1.bf16.msra.mxu0 0
    %105 = vmatprep.subr.bf16.mxu0 0
    %106 = vmatpush1.bf16.msra.mxu0 0
    %107 = vmatprep.subr.bf16.mxu0 0
    %108 = vmatpush1.bf16.msra.mxu0 0
    %109 = vmatprep.subr.bf16.mxu0 0
    %110 = vmatpush1.bf16.msra.mxu0 0
    %111 = vmatprep.subr.bf16.mxu0 0
    %112 = vmatpush1.bf16.msra.mxu0 0
    %113 = vmatprep.subr.bf16.mxu0 0
    %114 = vmatpush1.bf16.msra.mxu0 0
    %115 = vmatprep.subr.bf16.mxu0 0
    %116 = vmatpush1.bf16.msra.mxu0 0
    %117 = vmatprep.subr.bf16.mxu0 0
    %118 = vmatpush1.bf16.msra.mxu0 0
    %119 = vmatprep.mubr.bf16.mxu0 0
    %120 = vmatmul.mubr.bf16.gmra.mrb[0].mxu0 %v85
    %v121 = vpop.f32.mrb[0].mxu0
    %v122 = vadd.f32 %v75, %v121
    %v123 = vpop.f32.mrb[0].mxu0
    %v124 = vpop.f32.mrb[0].mxu0
    %v125 = vpop.f32.mrb[0].mxu0
    %126 = vdwg.mxu0
    %v127 = vmax.f32 %v122, 0.0
    %v128 = vpack.c.bf16 %v127, %v127
    %v129 = vld [vmem:[#allocation7] sm:$0xf]
    %v130 = vld [vmem:[#allocation7 + $0x4] sm:$0xf]
    %v131 = vld [vmem:[#allocation7 + $0x8] sm:$0xf]
    %v132 = vld [vmem:[#allocation7 + $0xc] sm:$0xf]
    %v133 = vld [vmem:[%s4] sm:$0x1]
    %v135 = vlaneseq
    %v136 = vshrl.u32 %v135, 7
    %v137 = vsub.s32 0, %v136
    %v138 = vrot.slane %v133, %v137
    %v144 = vunpack.c.l.b16 %v129
    %v145 = vunpack.c.l.b16 %v130
    %v146 = vunpack.c.l.b16 %v131
    %v147 = vunpack.c.l.b16 %v132
    %v148 = vpack.c.b16 %v145, %v144
    %v149 = vpack.c.b16 %v147, %v146
    %vm152 = vcmask 261120
    %v154 = vsel %vm152, %v128, 0
    %156 = vmatprep.subr.bf16.mxu0 0
    %157 = vmatpush1.bf16.msra.mxu0 %v148
    %158 = vmatprep.subr.bf16.mxu0 0
    %159 = vmatpush1.bf16.msra.mxu0 %v149
    %160 = vmatprep.subr.bf16.mxu0 0
    %161 = vmatpush1.bf16.msra.mxu0 0
    %162 = vmatprep.subr.bf16.mxu0 0
    %163 = vmatpush1.bf16.msra.mxu0 0
    %164 = vmatprep.subr.bf16.mxu0 0
    %165 = vmatpush1.bf16.msra.mxu0 0
    %166 = vmatprep.subr.bf16.mxu0 0
    %167 = vmatpush1.bf16.msra.mxu0 0
    %168 = vmatprep.subr.bf16.mxu0 0
    %169 = vmatpush1.bf16.msra.mxu0 0
    %170 = vmatprep.subr.bf16.mxu0 0
    %171 = vmatpush1.bf16.msra.mxu0 0
    %172 = vmatprep.subr.bf16.mxu0 0
    %173 = vmatpush1.bf16.msra.mxu0 0
    %174 = vmatprep.subr.bf16.mxu0 0
    %175 = vmatpush1.bf16.msra.mxu0 0
    %176 = vmatprep.subr.bf16.mxu0 0
    %177 = vmatpush1.bf16.msra.mxu0 0
    %178 = vmatprep.subr.bf16.mxu0 0
    %179 = vmatpush1.bf16.msra.mxu0 0
    %180 = vmatprep.subr.bf16.mxu0 0
    %181 = vmatpush1.bf16.msra.mxu0 0
    %182 = vmatprep.subr.bf16.mxu0 0
    %183 = vmatpush1.bf16.msra.mxu0 0
    %184 = vmatprep.subr.bf16.mxu0 0
    %185 = vmatpush1.bf16.msra.mxu0 0
    %186 = vmatprep.subr.bf16.mxu0 0
    %187 = vmatpush1.bf16.msra.mxu0 0
    %188 = vmatprep.mubr.bf16.mxu0 0
    %189 = vmatmul.mubr.bf16.gmra.mrb[0].mxu0 %v154
    %v190 = vpop.f32.mrb[0].mxu0
    %v191 = vadd.f32 %v138, %v190
    %v192 = vpop.f32.mrb[0].mxu0
    %v193 = vpop.f32.mrb[0].mxu0
    %v194 = vpop.f32.mrb[0].mxu0
    %195 = vdwg.mxu0
    %v196 = vmax.f32 %v191, 0.0
    %v197 = vpack.c.bf16 %v196, %v196
    %v198 = vld [vmem:[%s5] sm:$0xf]
    %v199 = vld [vmem:[%s5 + $0x4] sm:$0xf]
    %v200 = vld [vmem:[%s5 + $0x8] sm:$0xf]
    %v201 = vld [vmem:[%s5 + $0xc] sm:$0xf]
    %v202 = vld [vmem:[%s6] sm:$0x1]
    %v204 = vlaneseq
    %v205 = vshrl.u32 %v204, 7
    %v206 = vsub.s32 0, %v205
    %v207 = vrot.slane %v202, %v206
    %v213 = vunpack.c.l.b16 %v198
    %v214 = vunpack.c.l.b16 %v199
    %v215 = vunpack.c.l.b16 %v200
    %v216 = vunpack.c.l.b16 %v201
    %v217 = vpack.c.b16 %v214, %v213
    %v218 = vpack.c.b16 %v216, %v215
    %v222 = vsel %vm152, %v197, 0
    %224 = vmatprep.subr.bf16.mxu0 0
    %225 = vmatpush1.bf16.msra.mxu0 %v217
    %226 = vmatprep.subr.bf16.mxu0 0
    %227 = vmatpush1.bf16.msra.mxu0 %v218
    %228 = vmatprep.subr.bf16.mxu0 0
    %229 = vmatpush1.bf16.msra.mxu0 0
    %230 = vmatprep.subr.bf16.mxu0 0
    %231 = vmatpush1.bf16.msra.mxu0 0
    %232 = vmatprep.subr.bf16.mxu0 0
    %233 = vmatpush1.bf16.msra.mxu0 0
    %234 = vmatprep.subr.bf16.mxu0 0
    %235 = vmatpush1.bf16.msra.mxu0 0
    %236 = vmatprep.subr.bf16.mxu0 0
    %237 = vmatpush1.bf16.msra.mxu0 0
    %238 = vmatprep.subr.bf16.mxu0 0
    %239 = vmatpush1.bf16.msra.mxu0 0
    %240 = vmatprep.subr.bf16.mxu0 0
    %241 = vmatpush1.bf16.msra.mxu0 0
    %242 = vmatprep.subr.bf16.mxu0 0
    %243 = vmatpush1.bf16.msra.mxu0 0
    %244 = vmatprep.subr.bf16.mxu0 0
    %245 = vmatpush1.bf16.msra.mxu0 0
    %246 = vmatprep.subr.bf16.mxu0 0
    %247 = vmatpush1.bf16.msra.mxu0 0
    %248 = vmatprep.subr.bf16.mxu0 0
    %249 = vmatpush1.bf16.msra.mxu0 0
    %250 = vmatprep.subr.bf16.mxu0 0
    %251 = vmatpush1.bf16.msra.mxu0 0
    %252 = vmatprep.subr.bf16.mxu0 0
    %253 = vmatpush1.bf16.msra.mxu0 0
    %254 = vmatprep.subr.bf16.mxu0 0
    %255 = vmatpush1.bf16.msra.mxu0 0
    %256 = vmatprep.mubr.bf16.mxu0 0
    %257 = vmatmul.mubr.bf16.gmra.mrb[0].mxu0 %v222
    %v258 = vpop.f32.mrb[0].mxu0
    %v259 = vadd.f32 %v207, %v258
    %v260 = vpop.f32.mrb[0].mxu0
    %v261 = vpop.f32.mrb[0].mxu0
    %v262 = vpop.f32.mrb[0].mxu0
    %263 = vdwg.mxu0
    %v264 = vtanh.pop %v259
    %265 = vst [vmem:[#allocation8] sm:$0xff] %v264
    // Predicated region
    $region42: #{tpu_custom_call.1} parent=1 // pred_check
      _
    $region43: #{tpu_custom_call.1} parent=1 // pred_check_branch
      %267 = sbr.rel (0) target = $region45
    $region44: #{tpu_custom_call.1} parent=1 // pred_region
      %s269 = ssub.s32 128, 128
      %270 = vsyncadd [#allocation4], %s269
      %s272 = sshll.u32 [#allocation8], 4
      %s273 = int_to_ptr.vmem [resolvable:$true] %s272
      %275 = dma.vmem_to_hbm [thread:$0]  %s273, 128, %s7, [#allocation4]
    $region45: #{tpu_custom_call.1} parent=1 // pred_fallthru
      _
    // Predicated region
    $region46: #{tpu_custom_call.1} parent=1 // pred_check
      _
    $region47: #{tpu_custom_call.1} parent=1 // pred_check_branch
      %277 = sbr.rel (0) target = $region49
    $region48: #{tpu_custom_call.1} parent=1 // pred_region
      %278 = dma.done [#allocation4], 128
    $region49: #{tpu_custom_call.1} parent=1 // pred_fallthru
      _
    %279 = vsyncpa [#allocation3], 1
    %280 = vsyncpa [#allocation6], 1
    %281 = vsyncpa [#allocation4], 1

</llo_original>
